<compile_context>
chip_gen: v7x
topology: tpu7x:2x2x1
jax: 0.10.0
libtpu: 0.0.40
codegen_flags: <defaults>
</compile_context>

<pallas_src>
import functools
import math

import jax
import jax.numpy as jnp
from jax.experimental import pallas as pl
from jax.experimental.pallas import tpu as pltpu


def _conv1d_gemm_kernel(x_ref, w_ref, b_ref, o_ref, *, taps, c_in_p, n, l_out):
    """Single fused GEMM for the whole batch.

    x_ref: (S*C_in_p, L_q*N)  phase-decimated input, lane axis = (q, batch), q-major
    w_ref: (C_out, K*C_in_p)  tap-fused weights (zero rows for channel padding)
    b_ref: (C_out, 1)
    o_ref: (C_out, L_out*N)   lane axis = (t, batch), t-major
    """
    width = l_out * n
    # Build the (K*C_in_p, L_out*N) patch matrix from K contiguous lane slices.
    # Static slices + sublane concat only -- no strided VMEM access, no per-tap dot.
    patch = jnp.concatenate(
        [x_ref[p * c_in_p:(p + 1) * c_in_p, off * n: off * n + width]
         for (p, off) in taps],
        axis=0)
    acc = jnp.dot(w_ref[...], patch, preferred_element_type=jnp.float32)
    o_ref[...] = (acc + b_ref[...]).astype(o_ref.dtype)


def conv1d_same_padding(x, weight, bias, stride=1, dilation=1):
    """x: (N, C_in, L), weight: (C_out, C_in, K), bias: (C_out,). groups=1 only."""
    # TODO(synk): groups > 1 not implemented (groups=1 path only).
    n, c_in, l = x.shape
    c_out, _, k = weight.shape
    s, d = int(stride), int(dilation)

    # --- "same" padding math, identical to the PyTorch reference -------------
    l_out = (l + s - 1) // s
    pad_total = max(0, (l_out - 1) * s + (k - 1) * d + 1 - l)
    pad_left = pad_total // 2
    pad_right = pad_total - pad_left            # odd extra element goes right
    x_pad = jnp.pad(x, ((0, 0), (0, 0), (pad_left, pad_right)))
    l_pad = x_pad.shape[2]

    # --- tap -> (phase, offset) so every in-kernel slice is contiguous -------
    taps = tuple(((kk * d) % s, (kk * d) // s) for kk in range(k))
    off_max = max(off for _, off in taps)
    l_q = off_max + l_out                       # decimated length needed per phase

    # Pad channels up to a multiple of 8 sublanes (weights zero-padded to match).
    c_in_p = ((c_in + 7) // 8) * 8

    # --- phase-decimated, lane-major input slab (built wrapper-side with XLA) -
    # x2[p*C_in_p + c, q*N + b] = x_pad[b, c, q*s + p]
    phases = []
    for p in range(s):
        xp = x_pad[:, :, p::s]                  # (N, C_in, lq_p)
        lq_p = xp.shape[2]
        xp = jnp.pad(xp, ((0, 0), (0, c_in_p - c_in), (0, max(0, l_q - lq_p))))
        xp = xp[:, :, :l_q]                     # (N, C_in_p, L_q)
        phases.append(xp)
    x_ph = jnp.stack(phases, axis=0)            # (S, N, C_in_p, L_q)
    x2 = jnp.transpose(x_ph, (0, 2, 3, 1)).reshape(s * c_in_p, l_q * n)

    # Fused weights: w2[o, kk*C_in_p + c] = weight[o, c, kk] (zeros for pad rows).
    w_t = jnp.transpose(weight, (0, 2, 1))      # (C_out, K, C_in)
    w2 = jnp.pad(w_t, ((0, 0), (0, 0), (0, c_in_p - c_in))).reshape(c_out, k * c_in_p)
    b_col = bias.reshape(c_out, 1).astype(jnp.float32)

    kernel = functools.partial(_conv1d_gemm_kernel,
                               taps=taps, c_in_p=c_in_p, n=n, l_out=l_out)
    out2 = pl.pallas_call(
        kernel,
        out_shape=jax.ShapeDtypeStruct((c_out, l_out * n), x.dtype),
        grid_spec=pltpu.PrefetchScalarGridSpec(
            num_scalar_prefetch=0,
            grid=(1,),                          # whole problem fits VMEM: one step
            in_specs=[
                pl.BlockSpec((s * c_in_p, l_q * n), lambda i: (0, 0)),
                pl.BlockSpec((c_out, k * c_in_p), lambda i: (0, 0)),
                pl.BlockSpec((c_out, 1), lambda i: (0, 0)),
            ],
            out_specs=pl.BlockSpec((c_out, l_out * n), lambda i: (0, 0)),
        ),
        compiler_params=pltpu.CompilerParams(
            dimension_semantics=("arbitrary",)),
    )(x2, w2, b_col)

    # (C_out, L_out*N) -> (N, C_out, L_out)
    return jnp.transpose(out2.reshape(c_out, l_out, n), (2, 0, 1))


def _reference_conv1d_same(x, weight, bias, stride=1, dilation=1):
    """Pure-JAX reference for correctness checking (same math as PyTorch module)."""
    n, c_in, l = x.shape
    c_out, _, k = weight.shape
    l_out = (l + stride - 1) // stride
    pad_total = max(0, (l_out - 1) * stride + (k - 1) * dilation + 1 - l)
    x_pad = jnp.pad(x, ((0, 0), (0, 0),
                        (pad_total // 2, pad_total - pad_total // 2)))
    out = jnp.broadcast_to(bias[None, :, None], (n, c_out, l_out)).astype(jnp.float32)
    for kk in range(k):
        start = kk * dilation
        stop = start + (l_out - 1) * stride + 1
        xs = x_pad[:, :, start:stop:stride]     # (N, C_in, L_out)
        out = out + jnp.einsum('oc,ncl->nol', weight[:, :, kk], xs)
    return out.astype(x.dtype)


if __name__ == "__main__":
    # Module config: Conv1d(in_channels=4, out_channels=8, kernel_size=3)
    N, C_IN, C_OUT, L, K = 2, 4, 8, 16, 3

    key = jax.random.PRNGKey(0)
    kx, kw, kb = jax.random.split(key, 3)

    # Deterministic init matching _ConvNd.reset_parameters: U(-stdv, stdv),
    # stdv = 1/sqrt(in_channels * prod(kernel_size)).
    stdv = 1.0 / math.sqrt(C_IN * K)
    weight = jax.random.uniform(kw, (C_OUT, C_IN, K), jnp.float32, -stdv, stdv)
    bias = jax.random.uniform(kb, (C_OUT,), jnp.float32, -stdv, stdv)
    x = jax.random.normal(kx, (N, C_IN, L), jnp.float32)

    # Default module config: stride=1, dilation=1.
    out = conv1d_same_padding(x, weight, bias, stride=1, dilation=1)
    out = jax.block_until_ready(out)
    ref = _reference_conv1d_same(x, weight, bias, stride=1, dilation=1)
    assert out.shape == (N, C_OUT, L), out.shape
    assert jnp.allclose(out, ref, rtol=1e-5, atol=1e-5), "mismatch vs reference (stride=1)"

    # Also exercise the strided path (wrapper-side phase decimation, no in-kernel
    # strided slices).
    out_s2 = jax.block_until_ready(
        conv1d_same_padding(x, weight, bias, stride=2, dilation=1))
    ref_s2 = _reference_conv1d_same(x, weight, bias, stride=2, dilation=1)
    assert jnp.allclose(out_s2, ref_s2, rtol=1e-5, atol=1e-5), "mismatch vs reference (stride=2)"

    print("KERNEL_OK")
</pallas_src>

<mosaic_0001>
module attributes {stable_mosaic.version = 11 : i64} {
  func.func @_conv1d_gemm_kernel(%arg0: i32, %arg1: memref<8x36xf32, #tpu.memory_space<vmem>>, %arg2: memref<8x24xf32, #tpu.memory_space<vmem>>, %arg3: memref<8x1xf32, #tpu.memory_space<vmem>>, %arg4: memref<8x32xf32, #tpu.memory_space<vmem>>) attributes {dimension_semantics = [#tpu.dimension_semantics<arbitrary>], iteration_bounds = array<i64: 1>, scalar_prefetch = 0 : i64, scratch_operands = 0 : i64, tpu.core_type = #tpu.core_type<tc>, window_params = [{pipeline_mode = #tpu.pipeline_mode<synchronous>, transform_indices = @transform_0, window_bounds = array<i64: 8, 36>}, {pipeline_mode = #tpu.pipeline_mode<synchronous>, transform_indices = @transform_1, window_bounds = array<i64: 8, 24>}, {pipeline_mode = #tpu.pipeline_mode<synchronous>, transform_indices = @transform_2, window_bounds = array<i64: 8, 1>}, {pipeline_mode = #tpu.pipeline_mode<synchronous>, transform_indices = @transform_3, window_bounds = array<i64: 8, 32>}]} {
    %c0 = arith.constant 0 : index
    %c0_0 = arith.constant 0 : index
    %0 = vector.load %arg1[%c0, %c0_0] : memref<8x36xf32, #tpu.memory_space<vmem>>, vector<8x32xf32>
    %c0_1 = arith.constant 0 : index
    %c2 = arith.constant 2 : index
    %1 = vector.load %arg1[%c0_1, %c2] : memref<8x36xf32, #tpu.memory_space<vmem>>, vector<8x32xf32>
    %c0_2 = arith.constant 0 : index
    %c4 = arith.constant 4 : index
    %2 = vector.load %arg1[%c0_2, %c4] : memref<8x36xf32, #tpu.memory_space<vmem>>, vector<8x32xf32>
    %3 = tpu.concatenate %0, %1, %2 in 0 : vector<8x32xf32>, vector<8x32xf32>, vector<8x32xf32> -> vector<24x32xf32>
    %c0_3 = arith.constant 0 : index
    %c0_4 = arith.constant 0 : index
    %4 = vector.load %arg2[%c0_3, %c0_4] : memref<8x24xf32, #tpu.memory_space<vmem>>, vector<8x24xf32>
    %cst = arith.constant dense<0.000000e+00> : vector<8x32xf32>
    %5 = tpu.matmul %4, %3, %cst {dimension_numbers = #tpu.dot_dimension_numbers<[1], [0], [0], [1], [0, 0, 1, 1], [], []>} : vector<8x24xf32>, vector<24x32xf32>, vector<8x32xf32> -> vector<8x32xf32>
    %c0_5 = arith.constant 0 : index
    %c0_6 = arith.constant 0 : index
    %6 = vector.load %arg3[%c0_5, %c0_6] : memref<8x1xf32, #tpu.memory_space<vmem>>, vector<8x1xf32>
    %7 = vector.broadcast %6 : vector<8x1xf32> to vector<8x32xf32>
    %8 = arith.addf %5, %7 : vector<8x32xf32>
    %c0_7 = arith.constant 0 : index
    %c0_8 = arith.constant 0 : index
    %9 = vector.load %arg4[%c0_7, %c0_8] : memref<8x32xf32, #tpu.memory_space<vmem>>, vector<8x32xf32>
    tpu.vector_store %arg4[%c0_7, %c0_8], %8 {strides = array<i32>} : memref<8x32xf32, #tpu.memory_space<vmem>>, vector<8x32xf32>,
    return
  }
  func.func @transform_0(%arg0: i32) -> (i32, i32) {
    %c0_i32 = arith.constant 0 : i32
    %c0_i32_0 = arith.constant 0 : i32
    %c0_i32_1 = arith.constant 0 : i32
    return %c0_i32, %c0_i32_0 : i32, i32
  }
  func.func @transform_1(%arg0: i32) -> (i32, i32) {
    %c0_i32 = arith.constant 0 : i32
    %c0_i32_0 = arith.constant 0 : i32
    %c0_i32_1 = arith.constant 0 : i32
    return %c0_i32, %c0_i32_0 : i32, i32
  }
  func.func @transform_2(%arg0: i32) -> (i32, i32) {
    %c0_i32 = arith.constant 0 : i32
    %c0_i32_0 = arith.constant 0 : i32
    %c0_i32_1 = arith.constant 0 : i32
    return %c0_i32, %c0_i32_0 : i32, i32
  }
  func.func @transform_3(%arg0: i32) -> (i32, i32) {
    %c0_i32 = arith.constant 0 : i32
    %c0_i32_0 = arith.constant 0 : i32
    %c0_i32_1 = arith.constant 0 : i32
    return %c0_i32, %c0_i32_0 : i32, i32
  }
}

</mosaic_0001>

<llo_original>
// kernel: tpu_custom_call.1
$region0: #{tpu_custom_call.1}
  #allocation0 [shape = 'u32[]', space=smem, size = 0x4, offset = 0x4, fixed_abs, tag = 'smem constant byte address 0x4 - core index']
  #allocation1 [shape = 'u32[144,128]{1,0:T(1,128)}', space=vmem, size = 0x12000, scoped, tag = 'internal scratch']
  %s0 = inlined_call_operand.vmem [shape: f32[8,36], index: 0, kind: input, shape index: {}]
  %s1 = inlined_call_operand.hbm [shape: f32[8,24], index: 1, kind: input, shape index: {}]
  %s2 = inlined_call_operand.vmem [shape: f32[8,1], index: 2, kind: input, shape index: {}]
  %s3 = inlined_call_operand.hbm [shape: f32[8,32], index: 3, kind: output, shape index: {}]
  %s4 = sld [smem:[#allocation0]]
  $region26: #{tpu_custom_call.1} parent=0
    _
  %s6 = ssub.s32 1, %s4
  %s7 = scalar_select 0, %s6, %s4
  $region1: #{tpu_custom_call.1} parent=0
    #allocation2 [shape = 'u8[4096]{0}', space=vmem, size = 0x1000, scoped, tag = 'input window, operand 1, single buffered']
    #allocation3 [shape = 's32[1]{0}', space=sflag, size = 0x4, scoped, tag = 'scoped memory for tpu_custom_call.1']
    #allocation4 [shape = 's32[1]{0}', space=sflag, size = 0x4, scoped, tag = 'scoped memory for tpu_custom_call.1']
    #allocation5 [shape = 'u8[4096]{0}', space=vmem, size = 0x1000, scoped, tag = 'output window, operand 0, single buffered']
    %8 = vsyncpa [#allocation3], 0
    %9 = vsyncpa [#allocation4], 0
    // Predicated region
    $region2: #{tpu_custom_call.1} parent=1 // pred_check
      _
    $region3: #{tpu_custom_call.1} parent=1 // pred_check_branch
      %11 = sbr.rel (0) target = $region5
    $region4: #{tpu_custom_call.1} parent=1 // pred_region
      _
    $region5: #{tpu_custom_call.1} parent=1 // pred_fallthru
      _
    // Predicated region
    $region6: #{tpu_custom_call.1} parent=1 // pred_check
      _
    $region7: #{tpu_custom_call.1} parent=1 // pred_check_branch
      %13 = sbr.rel (0) target = $region9
    $region8: #{tpu_custom_call.1} parent=1 // pred_region
      %s15 = ssub.s32 128, 128
      %16 = vsyncadd [#allocation3], %s15
      %s18 = sshll.u32 [#allocation2], 4
      %s19 = int_to_ptr.vmem [resolvable:$true] %s18
      %21 = dma.hbm_to_vmem [thread:$0]  %s1, 128, %s19, [#allocation3]
    $region9: #{tpu_custom_call.1} parent=1 // pred_fallthru
      _
    // Predicated region
    $region10: #{tpu_custom_call.1} parent=1 // pred_check
      _
    $region11: #{tpu_custom_call.1} parent=1 // pred_check_branch
      %23 = sbr.rel (0) target = $region13
    $region12: #{tpu_custom_call.1} parent=1 // pred_region
      _
    $region13: #{tpu_custom_call.1} parent=1 // pred_fallthru
      _
    // Predicated region
    $region14: #{tpu_custom_call.1} parent=1 // pred_check
      _
    $region15: #{tpu_custom_call.1} parent=1 // pred_check_branch
      %25 = sbr.rel (0) target = $region17
    $region16: #{tpu_custom_call.1} parent=1 // pred_region
      %26 = dma.done [#allocation3], 128
    $region17: #{tpu_custom_call.1} parent=1 // pred_fallthru
      _
    %v27 = vld [vmem:[%s0] sm:$0xff]
    %29 = vrot.lane.b32.xlu0 %v27, 126
    %v30 = vpop.permute.xlu0 %29
    %32 = vrot.lane.b32.xlu0 %v27, 124
    %v33 = vpop.permute.xlu0 %32
    %v35 = vld [vmem:[#allocation2] sm:$0xff]
    %v36 = vld [vmem:[%s2] sm:$0xff]
    %38 = vset.pattern.permute.xlu0 0
    %39 = vperm.xlu0 %38, %v36
    %v40 = vpop.permute.xlu0 %39
    %vm42 = vcmask 195584
    %v44 = vsel %vm42, %v35, 0
    %46 = vmatprep.subr.mxu0 0.0
    %47 = vmatpush1.msra.mxu0 %v27
    %48 = vmatprep.subr.mxu0 0.0
    %49 = vmatpush1.msra.mxu0 %v30
    %50 = vmatprep.subr.mxu0 0.0
    %51 = vmatpush1.msra.mxu0 %v33
    %52 = vmatprep.subr.mxu0 0.0
    %53 = vmatpush1.msra.mxu0 0.0
    %54 = vmatprep.subr.mxu0 0.0
    %55 = vmatpush1.msra.mxu0 0.0
    %56 = vmatprep.subr.mxu0 0.0
    %57 = vmatpush1.msra.mxu0 0.0
    %58 = vmatprep.subr.mxu0 0.0
    %59 = vmatpush1.msra.mxu0 0.0
    %60 = vmatprep.subr.mxu0 0.0
    %61 = vmatpush1.msra.mxu0 0.0
    %62 = vmatprep.subr.mxu0 0.0
    %63 = vmatpush1.msra.mxu0 0.0
    %64 = vmatprep.subr.mxu0 0.0
    %65 = vmatpush1.msra.mxu0 0.0
    %66 = vmatprep.subr.mxu0 0.0
    %67 = vmatpush1.msra.mxu0 0.0
    %68 = vmatprep.subr.mxu0 0.0
    %69 = vmatpush1.msra.mxu0 0.0
    %70 = vmatprep.subr.mxu0 0.0
    %71 = vmatpush1.msra.mxu0 0.0
    %72 = vmatprep.subr.mxu0 0.0
    %73 = vmatpush1.msra.mxu0 0.0
    %74 = vmatprep.subr.mxu0 0.0
    %75 = vmatpush1.msra.mxu0 0.0
    %76 = vmatprep.subr.mxu0 0.0
    %77 = vmatpush1.msra.mxu0 0.0
    %78 = vmatprep.subr.mxu0 0.0
    %79 = vmatpush1.msra.mxu0 0.0
    %80 = vmatprep.subr.mxu0 0.0
    %81 = vmatpush1.msra.mxu0 0.0
    %82 = vmatprep.subr.mxu0 0.0
    %83 = vmatpush1.msra.mxu0 0.0
    %84 = vmatprep.subr.mxu0 0.0
    %85 = vmatpush1.msra.mxu0 0.0
    %86 = vmatprep.subr.mxu0 0.0
    %87 = vmatpush1.msra.mxu0 0.0
    %88 = vmatprep.subr.mxu0 0.0
    %89 = vmatpush1.msra.mxu0 0.0
    %90 = vmatprep.subr.mxu0 0.0
    %91 = vmatpush1.msra.mxu0 0.0
    %92 = vmatprep.subr.mxu0 0.0
    %93 = vmatpush1.msra.mxu0 0.0
    %94 = vmatprep.subr.mxu0 0.0
    %95 = vmatpush1.msra.mxu0 0.0
    %96 = vmatprep.subr.mxu0 0.0
    %97 = vmatpush1.msra.mxu0 0.0
    %98 = vmatprep.subr.mxu0 0.0
    %99 = vmatpush1.msra.mxu0 0.0
    %100 = vmatprep.subr.mxu0 0.0
    %101 = vmatpush1.msra.mxu0 0.0
    %102 = vmatprep.subr.mxu0 0.0
    %103 = vmatpush1.msra.mxu0 0.0
    %104 = vmatprep.subr.mxu0 0.0
    %105 = vmatpush1.msra.mxu0 0.0
    %106 = vmatprep.subr.mxu0 0.0
    %107 = vmatpush1.msra.mxu0 0.0
    %108 = vmatprep.subr.mxu0 0.0
    %109 = vmatpush1.msra.mxu0 0.0
    %110 = vmatprep.mubr.f32.mxu0 0.0
    %111 = vmatmul.mubr.f32.gmra.mrb[0].mxu0 %v44
    %v112 = vpop.f32.mrb[0].mxu0
    %v113 = vadd.f32 %v40, %v112
    %v114 = vpop.f32.mrb[0].mxu0
    %115 = vdwg.mxu0
    %vm116 = vcmask 261120
    %117 = vst.msk [vmem:[#allocation5] sm:$0xff] %vm116, %v113
    // Predicated region
    $region18: #{tpu_custom_call.1} parent=1 // pred_check
      _
    $region19: #{tpu_custom_call.1} parent=1 // pred_check_branch
      %119 = sbr.rel (0) target = $region21
    $region20: #{tpu_custom_call.1} parent=1 // pred_region
      %s121 = ssub.s32 128, 128
      %122 = vsyncadd [#allocation4], %s121
      %s124 = sshll.u32 [#allocation5], 4
      %s125 = int_to_ptr.vmem [resolvable:$true] %s124
      %127 = dma.vmem_to_hbm [thread:$0]  %s125, 128, %s3, [#allocation4]
    $region21: #{tpu_custom_call.1} parent=1 // pred_fallthru
      _
    // Predicated region
    $region22: #{tpu_custom_call.1} parent=1 // pred_check
      _
    $region23: #{tpu_custom_call.1} parent=1 // pred_check_branch
      %129 = sbr.rel (0) target = $region25
    $region24: #{tpu_custom_call.1} parent=1 // pred_region
      %130 = dma.done [#allocation4], 128
    $region25: #{tpu_custom_call.1} parent=1 // pred_fallthru
      _
    %131 = vsyncpa [#allocation3], 1
    %132 = vsyncpa [#allocation4], 1

</llo_original>
